<compile_context>
chip_gen: v5e
topology: v5e:2x2
jax: 0.10.0
libtpu: 0.0.40
codegen_flags: <defaults>
</compile_context>

<pallas_src>
import math

import jax
import jax.numpy as jnp
from jax import lax
from jax.experimental import pallas as pl
from jax.experimental.pallas import tpu as pltpu

_INV_SQRT2 = 1.0 / math.sqrt(2.0)


def _gelu_kernel(x_ref, o_ref):
    # Exact GeLU (matches torch): 0.5 * x * (1 + erf(x / sqrt(2))).
    # Compute in f32 for erf accuracy regardless of input dtype. (bf16 VALU on
    # v6e/v7x would halve op pressure, but f32 is kept for exactness vs torch.)
    xf = x_ref[...].astype(jnp.float32)
    y = 0.5 * xf * (1.0 + lax.erf(xf * _INV_SQRT2))
    o_ref[...] = y.astype(o_ref.dtype)
    # TODO(synk): if a v7x bundle dump shows VALU saturation from the erf
    # polynomial (~9 VALU ops/elem budget at 3.2 TB/s), add an opt-in
    # exp-based-erf / tanh-approx path so the transcendental lands on the idle
    # EUP slot.


def _pick_lane(n: int) -> int:
    """Widest lane width (multiple of 128) dividing n; 128 otherwise."""
    for lane in (1024, 512, 256, 128):
        if n % lane == 0:
            return lane
    return 128


def _tpu_block_budget():
    """Return (per-buffer bytes, tensorcores-per-chip) for this TPU generation.

    Sized to sit on the measured >=85%-of-roofline plateau while keeping the
    double-buffered in+out footprint comfortably under each generation's
    *default* scoped-VMEM limit (so no vmem_limit_bytes override is needed):
      v5e / other : 2 MiB/buffer ->  8 MiB total (16 MiB default scope)
      v6e         : 4 MiB/buffer -> 16 MiB total (32 MiB scope, 128 MiB phys)
      v7x         : 4 MiB/buffer -> 16 MiB total (32 MiB scope,  64 MiB phys), 2 TCs
    """
    try:
        kind = jax.devices()[0].device_kind.lower()
    except Exception:  # no devices visible / unusual backend: stay conservative
        return 2 << 20, 1
    is_v7 = ("v7" in kind) or ("7x" in kind)
    n_cores = 2 if is_v7 else 1
    if ("v6" in kind) or is_v7:
        return 4 << 20, n_cores
    return 2 << 20, n_cores


def gelu_pallas(x: jax.Array) -> jax.Array:
    """Exact (erf-based) GeLU, elementwise, via Pallas."""
    orig_shape = x.shape
    dtype = x.dtype
    n = x.size
    if n == 0:
        return x
    itemsize = jnp.dtype(dtype).itemsize

    per_buf_bytes, n_cores = _tpu_block_budget()

    lane = _pick_lane(n)
    x_flat = jnp.ravel(x)
    n_pad = pl.cdiv(n, lane) * lane
    padded = n_pad != n
    if padded:
        # Rare path (activation sizes are normally multiples of 128): pad only
        # to the next lane multiple (< lane extra elements).
        # TODO(synk): fuse the <lane-element tail into the kernel with a masked
        # pltpu.store at lane=128 to drop this pad + output-slice round trip.
        x_flat = jnp.pad(x_flat, (0, n_pad - n))
    rows = n_pad // lane
    x2d = x_flat.reshape(rows, lane)

    # Dtype-aware sublane packing: f32 -> 8 rows/vreg, bf16 -> 16, int8/fp8 -> 32.
    row_align = 8 * max(1, 4 // itemsize)

    total_bytes = n_pad * itemsize
    # Byte-based block: ~per_buf_bytes of data per buffer regardless of dtype.
    max_block_rows = max(row_align, (per_buf_bytes // itemsize) // lane)
    # On v7x, keep both TensorCores busy once the array is big enough to matter.
    want_split = (n_cores > 1) and (total_bytes >= (512 << 10))

    if rows <= max_block_rows and not want_split:
        # Single block covering the whole array: block_shape == array shape,
        # so no (8,128) alignment constraint and no multi-step overhead.
        block_rows = rows
        grid = (1,)
    else:
        min_blocks = n_cores if want_split else 1
        num_blocks = max(pl.cdiv(rows, max_block_rows), min_blocks)
        block_rows = pl.cdiv(pl.cdiv(rows, num_blocks), row_align) * row_align
        grid = (pl.cdiv(rows, block_rows),)  # ragged last block is masked

    cost = pl.CostEstimate(
        flops=20 * n_pad,            # ~erf polynomial + mul/add per element
        transcendentals=n_pad,       # one erf per element
        bytes_accessed=2 * n_pad * itemsize,
    )

    out2d = pl.pallas_call(
        _gelu_kernel,
        out_shape=jax.ShapeDtypeStruct((rows, lane), dtype),
        grid_spec=pltpu.PrefetchScalarGridSpec(
            num_scalar_prefetch=0,
            grid=grid,
            in_specs=[pl.BlockSpec((block_rows, lane), lambda i: (i, 0))],
            out_specs=pl.BlockSpec((block_rows, lane), lambda i: (i, 0)),
        ),
        compiler_params=pltpu.CompilerParams(
            # No-op on single-TC v5e/v6e; shards the grid across both
            # TensorCores on v7x.
            dimension_semantics=("parallel",),
        ),
        cost_estimate=cost,
    )(x2d)

    out_flat = out2d.reshape(-1)
    if padded:
        out_flat = out_flat[:n]
    return out_flat.reshape(orig_shape)


def gelu_ref(x):
    xf = x.astype(jnp.float32)
    return (0.5 * xf * (1.0 + lax.erf(xf * _INV_SQRT2))).astype(x.dtype)


if __name__ == "__main__":
    k1, k2, k3, k4 = jax.random.split(jax.random.PRNGKey(0), 4)

    # (B=2, C=4, H=16, W=16) NCHW activation: small-input single-block path.
    x = jax.random.normal(k1, (2, 4, 16, 16), dtype=jnp.float32) * 2.0
    y = jax.block_until_ready(gelu_pallas(x))
    assert y.shape == x.shape and y.dtype == x.dtype
    assert jnp.allclose(y, gelu_ref(x), atol=1e-6, rtol=1e-6), "small-path mismatch"

    # ~4.5 MiB f32 activation: multi-block path (and v7x 2-TC split / v5e ragged).
    x2 = jax.random.normal(k2, (8, 16, 96, 96), dtype=jnp.float32)
    y2 = jax.block_until_ready(gelu_pallas(x2))
    assert jnp.allclose(y2, gelu_ref(x2), atol=1e-6, rtol=1e-6), "tiled-path mismatch"

    # Non-128-divisible size exercises the padded-tail fallback.
    x3 = jax.random.normal(k3, (2, 3, 5, 7), dtype=jnp.float32)
    y3 = jax.block_until_ready(gelu_pallas(x3))
    assert jnp.allclose(y3, gelu_ref(x3), atol=1e-6, rtol=1e-6), "padded-path mismatch"

    # bf16 exercises the dtype-aware (byte-based) block sizing / sublane align.
    x4 = jax.random.normal(k4, (2, 8, 32, 32), dtype=jnp.bfloat16)
    y4 = jax.block_until_ready(gelu_pallas(x4))
    assert y4.dtype == jnp.bfloat16
    assert jnp.allclose(y4.astype(jnp.float32), gelu_ref(x4).astype(jnp.float32),
                        atol=1e-2, rtol=1e-2), "bf16-path mismatch"

    print("KERNEL_OK")
</pallas_src>

<mosaic_0001>
module attributes {stable_mosaic.version = 11 : i64} {
  func.func @_gelu_kernel(%arg0: i32, %arg1: memref<2x1024xf32, #tpu.memory_space<vmem>>, %arg2: memref<2x1024xf32, #tpu.memory_space<vmem>>) attributes {dimension_semantics = [#tpu.dimension_semantics<parallel>], iteration_bounds = array<i64: 1>, scalar_prefetch = 0 : i64, scratch_operands = 0 : i64, tpu.core_type = #tpu.core_type<tc>, window_params = [{transform_indices = @transform_0, window_bounds = array<i64: 2, 1024>}, {transform_indices = @transform_1, window_bounds = array<i64: 2, 1024>}]} {
    %c0 = arith.constant 0 : index
    %c0_0 = arith.constant 0 : index
    %0 = vector.load %arg1[%c0, %c0_0] : memref<2x1024xf32, #tpu.memory_space<vmem>>, vector<2x1024xf32>
    %cst = arith.constant 5.000000e-01 : f32
    %1 = vector.broadcast %cst : f32 to vector<2x1024xf32>
    %2 = arith.mulf %1, %0 : vector<2x1024xf32>
    %cst_1 = arith.constant 0.707106769 : f32
    %3 = vector.broadcast %cst_1 : f32 to vector<2x1024xf32>
    %4 = arith.mulf %0, %3 : vector<2x1024xf32>
    %5 = math.erf %4 : vector<2x1024xf32>
    %cst_2 = arith.constant 1.000000e+00 : f32
    %6 = vector.broadcast %cst_2 : f32 to vector<2x1024xf32>
    %7 = arith.addf %6, %5 : vector<2x1024xf32>
    %8 = arith.mulf %2, %7 : vector<2x1024xf32>
    %c0_3 = arith.constant 0 : index
    %c0_4 = arith.constant 0 : index
    %9 = vector.load %arg2[%c0_3, %c0_4] : memref<2x1024xf32, #tpu.memory_space<vmem>>, vector<2x1024xf32>
    tpu.vector_store %arg2[%c0_3, %c0_4], %8 {strides = array<i32>} : memref<2x1024xf32, #tpu.memory_space<vmem>>, vector<2x1024xf32>,
    return
  }
  func.func @transform_0(%arg0: i32) -> (i32, i32) {
    %c0_i32 = arith.constant 0 : i32
    %c0_i32_0 = arith.constant 0 : i32
    return %arg0, %c0_i32 : i32, i32
  }
  func.func @transform_1(%arg0: i32) -> (i32, i32) {
    %c0_i32 = arith.constant 0 : i32
    %c0_i32_0 = arith.constant 0 : i32
    return %arg0, %c0_i32 : i32, i32
  }
}

</mosaic_0001>

<llo_original>
// kernel: tpu_custom_call.1
$region0: #{tpu_custom_call.1}
  #allocation0 [shape = 'u32[]', space=smem, size = 0x4, offset = 0x4, fixed_abs, tag = 'smem constant byte address 0x4 - core index']
  #allocation1 [shape = 'u32[72,128]{1,0:T(1,128)}', space=vmem, size = 0x9000, scoped, tag = 'internal scratch']
  %s0 = inlined_call_operand.hbm [shape: f32[2,1024], index: 0, kind: input, shape index: {}]
  %s1 = inlined_call_operand.hbm [shape: f32[2,1024], index: 1, kind: output, shape index: {}]
  %s2 = sld [smem:[#allocation0]]
  $region18: #{tpu_custom_call.1} parent=0
    _
  %s4 = ssub.s32 1, %s2
  %s5 = scalar_select 0, %s4, %s2
  $region1: #{tpu_custom_call.1} parent=0
    #allocation2 [shape = 'u8[8192]{0}', space=vmem, size = 0x2000, scoped, tag = 'input window, operand 0, single buffered']
    #allocation3 [shape = 's32[1]{0}', space=sflag, size = 0x4, scoped, tag = 'scoped memory for tpu_custom_call.1']
    #allocation4 [shape = 's32[1]{0}', space=sflag, size = 0x4, scoped, tag = 'scoped memory for tpu_custom_call.1']
    #allocation5 [shape = 'u8[8192]{0}', space=vmem, size = 0x2000, scoped, tag = 'output window, operand 0, single buffered']
    %6 = vsyncpa [#allocation3], 0
    %7 = vsyncpa [#allocation4], 0
    // Predicated region
    $region2: #{tpu_custom_call.1} parent=1 // pred_check
      _
    $region3: #{tpu_custom_call.1} parent=1 // pred_check_branch
      %9 = sbr.rel (0) target = $region5
    $region4: #{tpu_custom_call.1} parent=1 // pred_region
      %11 = vsyncadd [#allocation3], 0
      %s13 = sshll.u32 %s0, 4
      %s14 = int_to_ptr.hbm [resolvable:$true] %s13
      %s15 = sshll.u32 [#allocation2], 4
      %s16 = int_to_ptr.vmem [resolvable:$true] %s15
      %18 = dma.hbm_to_vmem [thread:$0]  %s14, 256, %s16, [#allocation3]
    $region5: #{tpu_custom_call.1} parent=1 // pred_fallthru
      _
    // Predicated region
    $region6: #{tpu_custom_call.1} parent=1 // pred_check
      _
    $region7: #{tpu_custom_call.1} parent=1 // pred_check_branch
      %20 = sbr.rel (0) target = $region9
    $region8: #{tpu_custom_call.1} parent=1 // pred_region
      %22 = dma.done [#allocation3], 256
    $region9: #{tpu_custom_call.1} parent=1 // pred_fallthru
      _
    %v23 = vld [vmem:[#allocation2] sm:$0xff]
    %v24 = vld [vmem:[#allocation2 + $0x8] sm:$0xff]
    %v25 = vmul.f32 %v23, 0.5
    %v26 = vmul.f32 %v24, 0.5
    %v27 = vmul.f32 %v23, 0.70710677
    %v28 = vmul.f32 %v24, 0.70710677
    %v29 = vmul.f32 %v27, %v27
    %v30 = vmin.f32 16.0, %v29
    %v31 = vmul.f32 %v30, 2.1237322e-06
    %v32 = vadd.f32 %v31, 0.00028619796
    %v33 = vmul.f32 %v30, %v32
    %v34 = vadd.f32 %v33, 0.0036580483
    %v35 = vmul.f32 %v30, %v34
    %v36 = vadd.f32 %v35, 0.05243302
    %v37 = vmul.f32 %v30, %v36
    %v38 = vadd.f32 %v37, 0.18741608
    %v39 = vmul.f32 %v30, %v38
    %v40 = vadd.f32 %v39, 1.1283791
    %v41 = vmul.f32 %v27, %v40
    %v42 = vmul.f32 %v30, 3.8918573e-05
    %v43 = vadd.f32 %v42, 0.001143296
    %v44 = vmul.f32 %v30, %v43
    %v45 = vadd.f32 %v44, 0.014752088
    %v46 = vmul.f32 %v30, %v45
    %v47 = vadd.f32 %v46, 0.112945676
    %v48 = vmul.f32 %v30, %v47
    %v49 = vadd.f32 %v48, 0.4994258
    %v50 = vmul.f32 %v30, %v49
    %v51 = vadd.f32 %v50, 1.0
    %v52 = vrcp.pop %v51
    %v53 = vmul.f32 %v51, %v52
    %v54 = vsub.f32 1.0, %v53
    %v55 = vmul.f32 %v52, %v54
    %v56 = vadd.f32 %v52, %v55
    %vm57 = vweird.f32 %v51
    %vm58 = vweird.f32 %v52
    %vm59 = vmor %vm57, %vm58
    %v60 = vsel %vm59, %v52, %v56
    %v61 = vand.u32 2147483647, %v51
    %vm62 = vcmp.eq.f32.partialorder %v61, 8.507059e+37
    %v63 = vand.u32 %v51, 2147483648
    %v64 = vor.u32 1.1754944e-38, %v63
    %v65 = vsel %vm62, %v64, %v60
    %v66 = vmul.f32 %v41, %v65
    %v67 = vmin.f32 %v66, 1.0
    %v68 = vmax.f32 %v67, -1.0
    %v69 = vmul.f32 %v28, %v28
    %v70 = vmin.f32 16.0, %v69
    %v71 = vmul.f32 %v70, 2.1237322e-06
    %v72 = vadd.f32 %v71, 0.00028619796
    %v73 = vmul.f32 %v70, %v72
    %v74 = vadd.f32 %v73, 0.0036580483
    %v75 = vmul.f32 %v70, %v74
    %v76 = vadd.f32 %v75, 0.05243302
    %v77 = vmul.f32 %v70, %v76
    %v78 = vadd.f32 %v77, 0.18741608
    %v79 = vmul.f32 %v70, %v78
    %v80 = vadd.f32 %v79, 1.1283791
    %v81 = vmul.f32 %v28, %v80
    %v82 = vmul.f32 %v70, 3.8918573e-05
    %v83 = vadd.f32 %v82, 0.001143296
    %v84 = vmul.f32 %v70, %v83
    %v85 = vadd.f32 %v84, 0.014752088
    %v86 = vmul.f32 %v70, %v85
    %v87 = vadd.f32 %v86, 0.112945676
    %v88 = vmul.f32 %v70, %v87
    %v89 = vadd.f32 %v88, 0.4994258
    %v90 = vmul.f32 %v70, %v89
    %v91 = vadd.f32 %v90, 1.0
    %v92 = vrcp.pop %v91
    %v93 = vmul.f32 %v91, %v92
    %v94 = vsub.f32 1.0, %v93
    %v95 = vmul.f32 %v92, %v94
    %v96 = vadd.f32 %v92, %v95
    %vm97 = vweird.f32 %v91
    %vm98 = vweird.f32 %v92
    %vm99 = vmor %vm97, %vm98
    %v100 = vsel %vm99, %v92, %v96
    %v101 = vand.u32 2147483647, %v91
    %vm102 = vcmp.eq.f32.partialorder %v101, 8.507059e+37
    %v103 = vand.u32 %v91, 2147483648
    %v104 = vor.u32 1.1754944e-38, %v103
    %v105 = vsel %vm102, %v104, %v100
    %v106 = vmul.f32 %v81, %v105
    %v107 = vmin.f32 %v106, 1.0
    %v108 = vmax.f32 %v107, -1.0
    %v109 = vadd.f32 %v68, 1.0
    %v110 = vadd.f32 %v108, 1.0
    %v111 = vmul.f32 %v25, %v109
    %v112 = vmul.f32 %v26, %v110
    %113 = vst [vmem:[#allocation5] sm:$0xff] %v111
    %114 = vst [vmem:[#allocation5 + $0x8] sm:$0xff] %v112
    // Predicated region
    $region10: #{tpu_custom_call.1} parent=1 // pred_check
      _
    $region11: #{tpu_custom_call.1} parent=1 // pred_check_branch
      %116 = sbr.rel (0) target = $region13
    $region12: #{tpu_custom_call.1} parent=1 // pred_region
      %118 = vsyncadd [#allocation4], 0
      %s120 = sshll.u32 [#allocation5], 4
      %s121 = int_to_ptr.vmem [resolvable:$true] %s120
      %s122 = sshll.u32 %s1, 4
      %s123 = int_to_ptr.hbm [resolvable:$true] %s122
      %125 = dma.vmem_to_hbm [thread:$0]  %s121, 256, %s123, [#allocation4]
    $region13: #{tpu_custom_call.1} parent=1 // pred_fallthru
      _
    // Predicated region
    $region14: #{tpu_custom_call.1} parent=1 // pred_check
      _
    $region15: #{tpu_custom_call.1} parent=1 // pred_check_branch
      %127 = sbr.rel (0) target = $region17
    $region16: #{tpu_custom_call.1} parent=1 // pred_region
      %129 = dma.done [#allocation4], 256
    $region17: #{tpu_custom_call.1} parent=1 // pred_fallthru
      _
    %130 = vsyncpa [#allocation3], 1
    %131 = vsyncpa [#allocation4], 1

</llo_original>
